<compile_context>
chip_gen: v5e
topology: v5e:2x2
jax: 0.10.0
libtpu: 0.0.40
codegen_flags: <defaults>
</compile_context>

<pallas_src>
import functools

import jax
import jax.numpy as jnp
from jax.experimental import pallas as pl
from jax.experimental.pallas import tpu as pltpu

EPS = 1e-5


def _round_up(x, m):
    return ((x + m - 1) // m) * m


def _ceil_div(a, b):
    return -(-a // b)


def _channel_tile(c):
    """Channel tile: 256 (full MXU width on v6e/v7x) > 128 > full dim for small layers."""
    if c % 256 == 0:
        return 256
    if c % 128 == 0:
        return 128
    return c


# ----------------------------- Pallas kernel --------------------------------
def _conv_taps_kernel(*refs, tap_shifts, relu, shortcut, mout):
    """Direct 3x3 conv as 9 shifted matmuls over a flattened phase-stacked input.

    Grid = (batch, Cout-tiles, Cin-tiles); Cin is the innermost ("arbitrary") axis.
    refs layout:
      shortcut is None      : x, w, b, o, acc
      shortcut == "identity": x, w, b, res, o, acc
      shortcut == "proj"    : x, w, b, xs, ws, o, acc
    x_ref: (1, P*Lph, tk) flattened padded phases; w_ref: (9, tk, tn); b_ref: (1, tn).
    """
    if shortcut == "proj":
        x_ref, w_ref, b_ref, xs_ref, ws_ref, o_ref, acc_ref = refs
    elif shortcut == "identity":
        x_ref, w_ref, b_ref, res_ref, o_ref, acc_ref = refs
    else:
        x_ref, w_ref, b_ref, o_ref, acc_ref = refs

    k = pl.program_id(2)

    @pl.when(k == 0)
    def _():
        if shortcut == "proj":
            # 1x1 projection shortcut initializes the accumulator: it rides the pipelined
            # main body (and its bias is pre-summed into b_ref) instead of an epilogue dot.
            acc_ref[...] = jnp.dot(xs_ref[0], ws_ref[...],
                                   preferred_element_type=jnp.float32)
        else:
            acc_ref[...] = jnp.zeros_like(acc_ref)

    # 9 taps folded into the reduction: each tap is a statically shifted window of the
    # flattened phase-stacked padded input (no im2col materialization in HBM).
    acc = acc_ref[...]
    for t, shift in enumerate(tap_shifts):
        xa = x_ref[0, pl.ds(shift, mout), :]                      # (Mout, tk) bf16 view
        acc = acc + jnp.dot(xa, w_ref[t], preferred_element_type=jnp.float32)
    acc_ref[...] = acc

    @pl.when(k == pl.num_programs(2) - 1)
    def _():
        out = acc + b_ref[...].astype(jnp.float32)
        if shortcut == "identity":
            out = out + res_ref[0].astype(jnp.float32)
        if relu:
            out = jnp.maximum(out, 0.0)
        o_ref[0, :, :] = out.astype(o_ref.dtype)


# ------------------------------ JAX glue -------------------------------------
def _build_phases(x, stride, cin_pad):
    """Zero-pad (conv pad=1) and phase-decompose an NHWC image by `stride`.

    Returns (xflat, Hph, Wph, Lph): xflat has shape (N, stride^2 * Lph, cin_pad) where each
    of the stride^2 phases occupies a contiguous Lph = (Hph+1)*Wph window (the extra zero
    row absorbs over-reads from the discarded garbage output columns). Single HBM pass.
    """
    N, H, W, C = x.shape
    s = stride
    Hph = _ceil_div(H + 2, s)
    Wph = _ceil_div(W + 2, s)
    pad_b = s * (Hph + 1) - (H + 1)
    pad_r = s * Wph - (W + 1)
    xp = jnp.pad(x, ((0, 0), (1, pad_b), (1, pad_r), (0, cin_pad - C)))
    xp = xp.reshape(N, Hph + 1, s, Wph, s, cin_pad)
    xp = jnp.transpose(xp, (0, 2, 4, 1, 3, 5))                    # (N, s, s, Hph+1, Wph, C)
    return xp.reshape(N, s * s * (Hph + 1) * Wph, cin_pad), Hph, Wph, (Hph + 1) * Wph


def fused_conv3x3(x, w_taps, bias, *, stride, relu, res=None, xs=None, ws=None):
    """3x3 conv (pad=1) + folded-BN bias + optional (identity | 1x1-proj) residual + ReLU.

    x:      (N, H, W, Cin)    activations (cast to bf16)
    w_taps: (9, Cin, Cout)    BN-scale-folded weights, tap-major (kh*3+kw)
    bias:   (Cout,)           f32 folded BN bias (pre-summed with shortcut bias for proj)
    res:    (N, Ho, Wo, Cout) identity residual (optional)
    xs:     (N, Ho, Wo, Cs) + ws (Cs, Cout): 1x1 projection shortcut (optional)
    Returns (N, Ho, Wo, Cout) bf16.
    """
    N, H, W, Cin = x.shape
    Cout = w_taps.shape[-1]
    s = stride
    Ho = (H - 1) // s + 1
    Wo = (W - 1) // s + 1

    Cin8 = _round_up(Cin, 8)          # MXU/sublane-friendly K; folded into the single pad pass
    xflat, Hph, Wph, Lph = _build_phases(x.astype(jnp.bfloat16), s, Cin8)
    Mout = Ho * Wph                   # flat output rows (Wph-Wo garbage cols per row, discarded)

    # tap (kh,kw) -> static flat shift into the phase-stacked input
    tap_shifts = []
    for kh in range(3):
        for kw in range(3):
            p = (kh % s) * s + (kw % s)
            tap_shifts.append(p * Lph + (kh // s) * Wph + (kw // s))

    wt = jnp.zeros((9, Cin8, Cout), jnp.bfloat16).at[:, :Cin, :].set(
        w_taps.astype(jnp.bfloat16))
    bias_row = bias.reshape(1, Cout).astype(jnp.float32)

    tk = _channel_tile(Cin8)
    tn = _channel_tile(Cout)
    n_k = Cin8 // tk
    n_j = Cout // tn

    inputs = [xflat, wt, bias_row]
    in_specs = [
        pl.BlockSpec((1, s * s * Lph, tk), lambda n, j, k: (n, 0, k)),
        pl.BlockSpec((9, tk, tn), lambda n, j, k: (0, k, j)),
        pl.BlockSpec((1, tn), lambda n, j, k: (0, j)),
    ]

    if res is not None:
        shortcut = "identity"
        r = jnp.pad(res.astype(jnp.bfloat16),
                    ((0, 0), (0, 0), (0, Wph - Wo), (0, 0))).reshape(N, Mout, Cout)
        inputs.append(r)
        in_specs.append(pl.BlockSpec((1, Mout, tn), lambda n, j, k: (n, 0, j)))
    elif xs is not None:
        shortcut = "proj"
        Cs = xs.shape[-1]
        Cs8 = _round_up(Cs, 8)
        xsf = jnp.pad(xs.astype(jnp.bfloat16),
                      ((0, 0), (0, 0), (0, Wph - Wo), (0, Cs8 - Cs))).reshape(N, Mout, Cs8)
        wsp = jnp.zeros((Cs8, Cout), jnp.bfloat16).at[:Cs, :].set(ws.astype(jnp.bfloat16))
        inputs += [xsf, wsp]
        in_specs += [
            pl.BlockSpec((1, Mout, Cs8), lambda n, j, k: (n, 0, 0)),
            pl.BlockSpec((Cs8, tn), lambda n, j, k: (0, j)),
        ]
    else:
        shortcut = None

    kernel = functools.partial(_conv_taps_kernel, tap_shifts=tuple(tap_shifts),
                               relu=relu, shortcut=shortcut, mout=Mout)
    out = pl.pallas_call(
        kernel,
        out_shape=jax.ShapeDtypeStruct((N, Mout, Cout), jnp.bfloat16),
        grid=(N, n_j, n_k),
        in_specs=in_specs,
        out_specs=pl.BlockSpec((1, Mout, tn), lambda n, j, k: (n, 0, j)),
        scratch_shapes=[pltpu.VMEM((Mout, tn), jnp.float32)],
        compiler_params=pltpu.CompilerParams(
            dimension_semantics=("parallel", "parallel", "arbitrary"),
            vmem_limit_bytes=48 * 1024 * 1024,   # fits v7x's 64 MiB VMEM per TC
        ),
    )(*inputs)

    return out.reshape(N, Ho, Wph, Cout)[:, :, :Wo, :]


def fold_bn(bn):
    """Inference-mode BN folded into per-channel scale/bias (f32)."""
    scale = bn["gamma"] / jnp.sqrt(bn["var"] + EPS)
    bias = bn["beta"] - bn["mean"] * scale
    return scale, bias


def w_to_taps(w_oihw, scale):
    """(Cout, Cin, 3, 3) -> (9, Cin, Cout) tap-major, BN scale folded into Cout."""
    cout, cin = w_oihw.shape[0], w_oihw.shape[1]
    w = jnp.transpose(w_oihw, (2, 3, 1, 0)).reshape(9, cin, cout)
    return w * scale[None, None, :]


def init_resblock_params(key, inc, outc, stride):
    ks = jax.random.split(key, 12)

    def bn_params(k, c):
        k0, k1, k2, k3 = jax.random.split(k, 4)
        return {
            "gamma": 1.0 + 0.1 * jax.random.normal(k0, (c,), jnp.float32),
            "beta": 0.1 * jax.random.normal(k1, (c,), jnp.float32),
            "mean": 0.1 * jax.random.normal(k2, (c,), jnp.float32),
            "var": 0.5 + jnp.abs(jax.random.normal(k3, (c,), jnp.float32)),
        }

    p = {
        "w1": 0.2 * jax.random.normal(ks[0], (outc, inc, 3, 3), jnp.float32),
        "bn1": bn_params(ks[1], outc),
        "w2": 0.2 * jax.random.normal(ks[2], (outc, outc, 3, 3), jnp.float32),
        "bn2": bn_params(ks[3], outc),
        "stride": stride,
        "inc": inc,
        "outc": outc,
    }
    if stride != 1 or inc != outc:
        p["ws"] = 0.2 * jax.random.normal(ks[4], (outc, inc, 1, 1), jnp.float32)
        p["bns"] = bn_params(ks[5], outc)
    return p


def resblock_forward(x_nchw, p):
    stride, inc, outc = p["stride"], p["inc"], p["outc"]
    x = jnp.transpose(x_nchw, (0, 2, 3, 1)).astype(jnp.bfloat16)   # NHWC, bf16 activations

    # conv1 (3x3, stride) + BN + ReLU
    s1, b1 = fold_bn(p["bn1"])
    y1 = fused_conv3x3(x, w_to_taps(p["w1"], s1), b1, stride=stride, relu=True)

    # conv2 (3x3, s=1) + BN + shortcut (identity or 1x1-conv+BN) + ReLU — one fused kernel
    s2, b2 = fold_bn(p["bn2"])
    w2t = w_to_taps(p["w2"], s2)
    if stride != 1 or inc != outc:
        ss, bs = fold_bn(p["bns"])
        ws = jnp.transpose(p["ws"].reshape(outc, inc), (1, 0)) * ss[None, :]
        xs = x[:, ::stride, ::stride, :]
        out = fused_conv3x3(y1, w2t, b2 + bs, stride=1, relu=True, xs=xs, ws=ws)
    else:
        out = fused_conv3x3(y1, w2t, b2, stride=1, relu=True, res=x)

    # f32 NCHW only to match the PyTorch module interface (see TODO at top).
    return jnp.transpose(out.astype(jnp.float32), (0, 3, 1, 2))


# ------------------------------ reference ------------------------------------
def resblock_reference(x_nchw, p):
    """lax.conv reference mirroring the kernel's bf16 operand / f32-accumulate arithmetic."""
    stride, inc, outc = p["stride"], p["inc"], p["outc"]
    x = jnp.transpose(x_nchw, (0, 2, 3, 1)).astype(jnp.float32)
    x = x.astype(jnp.bfloat16).astype(jnp.float32)

    def folded_conv(xin, w_oihw, bn, st, padding):
        s, b = fold_bn(bn)
        w_hwio = jnp.transpose(w_oihw, (2, 3, 1, 0)) * s
        w_hwio = w_hwio.astype(jnp.bfloat16).astype(jnp.float32)
        xin = xin.astype(jnp.bfloat16).astype(jnp.float32)
        y = jax.lax.conv_general_dilated(
            xin, w_hwio, window_strides=(st, st), padding=padding,
            dimension_numbers=("NHWC", "HWIO", "NHWC"),
            precision=jax.lax.Precision.HIGHEST,
        )
        return y + b

    y1 = jnp.maximum(folded_conv(x, p["w1"], p["bn1"], stride, ((1, 1), (1, 1))), 0.0)
    y1 = y1.astype(jnp.bfloat16).astype(jnp.float32)            # bf16 handoff, like the kernel
    y2 = folded_conv(y1, p["w2"], p["bn2"], 1, ((1, 1), (1, 1)))
    if stride != 1 or inc != outc:
        s = folded_conv(x, p["ws"], p["bns"], stride, "VALID")
    else:
        s = x
    out = jnp.maximum(y2 + s, 0.0).astype(jnp.bfloat16).astype(jnp.float32)
    return jnp.transpose(out, (0, 3, 1, 2))


# -------------------------------- main ----------------------------------------
if __name__ == "__main__":
    key = jax.random.PRNGKey(0)
    kx, kp, kx2, kp2 = jax.random.split(key, 4)

    # Case 1: projection shortcut (stride=2, inc != outc)
    N, inc, H, W = 2, 4, 16, 16
    outc, stride = 8, 2
    x = jax.random.normal(kx, (N, inc, H, W), jnp.float32)
    params = init_resblock_params(kp, inc, outc, stride)
    out = jax.block_until_ready(resblock_forward(x, params))
    ref = jax.block_until_ready(resblock_reference(x, params))
    assert out.shape == ref.shape == (N, outc, H // stride, W // stride)
    assert jnp.allclose(out, ref, rtol=2e-2, atol=2e-2), float(jnp.max(jnp.abs(out - ref)))

    # Case 2: identity shortcut (stride=1, inc == outc) — exercises the residual kernel path
    N2, c2, H2, W2 = 2, 8, 16, 16
    x2 = jax.random.normal(kx2, (N2, c2, H2, W2), jnp.float32)
    params2 = init_resblock_params(kp2, c2, c2, 1)
    out2 = jax.block_until_ready(resblock_forward(x2, params2))
    ref2 = jax.block_until_ready(resblock_reference(x2, params2))
    assert out2.shape == ref2.shape == (N2, c2, H2, W2)
    assert jnp.allclose(out2, ref2, rtol=2e-2, atol=2e-2), float(jnp.max(jnp.abs(out2 - ref2)))

    print("KERNEL_OK")
</pallas_src>

<mosaic_0001>
module attributes {stable_mosaic.version = 11 : i64} {
  func.func @_conv_taps_kernel(%arg0: i32, %arg1: i32, %arg2: i32, %arg3: memref<1x360x8xbf16, #tpu.memory_space<vmem>>, %arg4: memref<9x8x8xbf16, #tpu.memory_space<vmem>>, %arg5: memref<1x8xf32, #tpu.memory_space<vmem>>, %arg6: memref<1x72x8xbf16, #tpu.memory_space<vmem>>, %arg7: memref<72x8xf32, #tpu.memory_space<vmem>>) attributes {dimension_semantics = [#tpu.dimension_semantics<parallel>, #tpu.dimension_semantics<parallel>, #tpu.dimension_semantics<arbitrary>], iteration_bounds = array<i64: 2, 1, 1>, scalar_prefetch = 0 : i64, scratch_operands = 1 : i64, tpu.core_type = #tpu.core_type<tc>, window_params = [{transform_indices = @transform_0, window_bounds = array<i64: 1, 360, 8>}, {transform_indices = @transform_1, window_bounds = array<i64: 9, 8, 8>}, {transform_indices = @transform_2, window_bounds = array<i64: 1, 8>}, {transform_indices = @transform_3, window_bounds = array<i64: 1, 72, 8>}]} {
    %c0_i32 = arith.constant 0 : i32
    %0 = arith.cmpi eq, %arg2, %c0_i32 : i32
    %1 = arith.extui %0 : i1 to i32
    %c0_i32_0 = arith.constant 0 : i32
    %2 = arith.cmpi ne, %1, %c0_i32_0 : i32
    scf.if %2 {
      %cst_53 = arith.constant 0.000000e+00 : f32
      %62 = vector.broadcast %cst_53 : f32 to vector<72x8xf32>
      %c0_54 = arith.constant 0 : index
      %c0_55 = arith.constant 0 : index
      %63 = vector.load %arg7[%c0_54, %c0_55] : memref<72x8xf32, #tpu.memory_space<vmem>>, vector<72x8xf32>
      tpu.vector_store %arg7[%c0_54, %c0_55], %62 {strides = array<i32>} : memref<72x8xf32, #tpu.memory_space<vmem>>, vector<72x8xf32>,
    } else {
    }
    %c0 = arith.constant 0 : index
    %c0_1 = arith.constant 0 : index
    %3 = vector.load %arg7[%c0, %c0_1] : memref<72x8xf32, #tpu.memory_space<vmem>>, vector<72x8xf32>
    %c0_2 = arith.constant 0 : index
    %c0_3 = arith.constant 0 : index
    %c0_4 = arith.constant 0 : index
    %4 = vector.load %arg3[%c0_2, %c0_3, %c0_4] : memref<1x360x8xbf16, #tpu.memory_space<vmem>>, vector<1x72x8xbf16>
    %5 = vector.shape_cast %4 : vector<1x72x8xbf16> to vector<72x8xbf16>
    %c0_5 = arith.constant 0 : index
    %c0_6 = arith.constant 0 : index
    %c0_7 = arith.constant 0 : index
    %6 = vector.load %arg4[%c0_5, %c0_6, %c0_7] : memref<9x8x8xbf16, #tpu.memory_space<vmem>>, vector<1x8x8xbf16>
    %7 = vector.shape_cast %6 : vector<1x8x8xbf16> to vector<8x8xbf16>
    %cst = arith.constant dense<0.000000e+00> : vector<72x8xf32>
    %8 = tpu.matmul %5, %7, %cst {dimension_numbers = #tpu.dot_dimension_numbers<[1], [0], [0], [1], [0, 0, 1, 1], [], []>} : vector<72x8xbf16>, vector<8x8xbf16>, vector<72x8xf32> -> vector<72x8xf32>
    %9 = arith.addf %3, %8 : vector<72x8xf32>
    %c0_8 = arith.constant 0 : index
    %c90 = arith.constant 90 : index
    %c0_9 = arith.constant 0 : index
    %10 = vector.load %arg3[%c0_8, %c90, %c0_9] : memref<1x360x8xbf16, #tpu.memory_space<vmem>>, vector<1x72x8xbf16>
    %11 = vector.shape_cast %10 : vector<1x72x8xbf16> to vector<72x8xbf16>
    %c1 = arith.constant 1 : index
    %c0_10 = arith.constant 0 : index
    %c0_11 = arith.constant 0 : index
    %12 = vector.load %arg4[%c1, %c0_10, %c0_11] : memref<9x8x8xbf16, #tpu.memory_space<vmem>>, vector<1x8x8xbf16>
    %13 = vector.shape_cast %12 : vector<1x8x8xbf16> to vector<8x8xbf16>
    %cst_12 = arith.constant dense<0.000000e+00> : vector<72x8xf32>
    %14 = tpu.matmul %11, %13, %cst_12 {dimension_numbers = #tpu.dot_dimension_numbers<[1], [0], [0], [1], [0, 0, 1, 1], [], []>} : vector<72x8xbf16>, vector<8x8xbf16>, vector<72x8xf32> -> vector<72x8xf32>
    %15 = arith.addf %9, %14 : vector<72x8xf32>
    %c0_13 = arith.constant 0 : index
    %c1_14 = arith.constant 1 : index
    %c0_15 = arith.constant 0 : index
    %16 = vector.load %arg3[%c0_13, %c1_14, %c0_15] : memref<1x360x8xbf16, #tpu.memory_space<vmem>>, vector<1x72x8xbf16>
    %17 = vector.shape_cast %16 : vector<1x72x8xbf16> to vector<72x8xbf16>
    %c2 = arith.constant 2 : index
    %c0_16 = arith.constant 0 : index
    %c0_17 = arith.constant 0 : index
    %18 = vector.load %arg4[%c2, %c0_16, %c0_17] : memref<9x8x8xbf16, #tpu.memory_space<vmem>>, vector<1x8x8xbf16>
    %19 = vector.shape_cast %18 : vector<1x8x8xbf16> to vector<8x8xbf16>
    %cst_18 = arith.constant dense<0.000000e+00> : vector<72x8xf32>
    %20 = tpu.matmul %17, %19, %cst_18 {dimension_numbers = #tpu.dot_dimension_numbers<[1], [0], [0], [1], [0, 0, 1, 1], [], []>} : vector<72x8xbf16>, vector<8x8xbf16>, vector<72x8xf32> -> vector<72x8xf32>
    %21 = arith.addf %15, %20 : vector<72x8xf32>
    %c0_19 = arith.constant 0 : index
    %c180 = arith.constant 180 : index
    %c0_20 = arith.constant 0 : index
    %22 = vector.load %arg3[%c0_19, %c180, %c0_20] : memref<1x360x8xbf16, #tpu.memory_space<vmem>>, vector<1x72x8xbf16>
    %23 = vector.shape_cast %22 : vector<1x72x8xbf16> to vector<72x8xbf16>
    %c3 = arith.constant 3 : index
    %c0_21 = arith.constant 0 : index
    %c0_22 = arith.constant 0 : index
    %24 = vector.load %arg4[%c3, %c0_21, %c0_22] : memref<9x8x8xbf16, #tpu.memory_space<vmem>>, vector<1x8x8xbf16>
    %25 = vector.shape_cast %24 : vector<1x8x8xbf16> to vector<8x8xbf16>
    %cst_23 = arith.constant dense<0.000000e+00> : vector<72x8xf32>
    %26 = tpu.matmul %23, %25, %cst_23 {dimension_numbers = #tpu.dot_dimension_numbers<[1], [0], [0], [1], [0, 0, 1, 1], [], []>} : vector<72x8xbf16>, vector<8x8xbf16>, vector<72x8xf32> -> vector<72x8xf32>
    %27 = arith.addf %21, %26 : vector<72x8xf32>
    %c0_24 = arith.constant 0 : index
    %c270 = arith.constant 270 : index
    %c0_25 = arith.constant 0 : index
    %28 = vector.load %arg3[%c0_24, %c270, %c0_25] : memref<1x360x8xbf16, #tpu.memory_space<vmem>>, vector<1x72x8xbf16>
    %29 = vector.shape_cast %28 : vector<1x72x8xbf16> to vector<72x8xbf16>
    %c4 = arith.constant 4 : index
    %c0_26 = arith.constant 0 : index
    %c0_27 = arith.constant 0 : index
    %30 = vector.load %arg4[%c4, %c0_26, %c0_27] : memref<9x8x8xbf16, #tpu.memory_space<vmem>>, vector<1x8x8xbf16>
    %31 = vector.shape_cast %30 : vector<1x8x8xbf16> to vector<8x8xbf16>
    %cst_28 = arith.constant dense<0.000000e+00> : vector<72x8xf32>
    %32 = tpu.matmul %29, %31, %cst_28 {dimension_numbers = #tpu.dot_dimension_numbers<[1], [0], [0], [1], [0, 0, 1, 1], [], []>} : vector<72x8xbf16>, vector<8x8xbf16>, vector<72x8xf32> -> vector<72x8xf32>
    %33 = arith.addf %27, %32 : vector<72x8xf32>
    %c0_29 = arith.constant 0 : index
    %c181 = arith.constant 181 : index
    %c0_30 = arith.constant 0 : index
    %34 = vector.load %arg3[%c0_29, %c181, %c0_30] : memref<1x360x8xbf16, #tpu.memory_space<vmem>>, vector<1x72x8xbf16>
    %35 = vector.shape_cast %34 : vector<1x72x8xbf16> to vector<72x8xbf16>
    %c5 = arith.constant 5 : index
    %c0_31 = arith.constant 0 : index
    %c0_32 = arith.constant 0 : index
    %36 = vector.load %arg4[%c5, %c0_31, %c0_32] : memref<9x8x8xbf16, #tpu.memory_space<vmem>>, vector<1x8x8xbf16>
    %37 = vector.shape_cast %36 : vector<1x8x8xbf16> to vector<8x8xbf16>
    %cst_33 = arith.constant dense<0.000000e+00> : vector<72x8xf32>
    %38 = tpu.matmul %35, %37, %cst_33 {dimension_numbers = #tpu.dot_dimension_numbers<[1], [0], [0], [1], [0, 0, 1, 1], [], []>} : vector<72x8xbf16>, vector<8x8xbf16>, vector<72x8xf32> -> vector<72x8xf32>
    %39 = arith.addf %33, %38 : vector<72x8xf32>
    %c0_34 = arith.constant 0 : index
    %c9 = arith.constant 9 : index
    %c0_35 = arith.constant 0 : index
    %40 = vector.load %arg3[%c0_34, %c9, %c0_35] : memref<1x360x8xbf16, #tpu.memory_space<vmem>>, vector<1x72x8xbf16>
    %41 = vector.shape_cast %40 : vector<1x72x8xbf16> to vector<72x8xbf16>
    %c6 = arith.constant 6 : index
    %c0_36 = arith.constant 0 : index
    %c0_37 = arith.constant 0 : index
    %42 = vector.load %arg4[%c6, %c0_36, %c0_37] : memref<9x8x8xbf16, #tpu.memory_space<vmem>>, vector<1x8x8xbf16>
    %43 = vector.shape_cast %42 : vector<1x8x8xbf16> to vector<8x8xbf16>
    %cst_38 = arith.constant dense<0.000000e+00> : vector<72x8xf32>
    %44 = tpu.matmul %41, %43, %cst_38 {dimension_numbers = #tpu.dot_dimension_numbers<[1], [0], [0], [1], [0, 0, 1, 1], [], []>} : vector<72x8xbf16>, vector<8x8xbf16>, vector<72x8xf32> -> vector<72x8xf32>
    %45 = arith.addf %39, %44 : vector<72x8xf32>
    %c0_39 = arith.constant 0 : index
    %c99 = arith.constant 99 : index
    %c0_40 = arith.constant 0 : index
    %46 = vector.load %arg3[%c0_39, %c99, %c0_40] : memref<1x360x8xbf16, #tpu.memory_space<vmem>>, vector<1x72x8xbf16>
    %47 = vector.shape_cast %46 : vector<1x72x8xbf16> to vector<72x8xbf16>
    %c7 = arith.constant 7 : index
    %c0_41 = arith.constant 0 : index
    %c0_42 = arith.constant 0 : index
    %48 = vector.load %arg4[%c7, %c0_41, %c0_42] : memref<9x8x8xbf16, #tpu.memory_space<vmem>>, vector<1x8x8xbf16>
    %49 = vector.shape_cast %48 : vector<1x8x8xbf16> to vector<8x8xbf16>
    %cst_43 = arith.constant dense<0.000000e+00> : vector<72x8xf32>
    %50 = tpu.matmul %47, %49, %cst_43 {dimension_numbers = #tpu.dot_dimension_numbers<[1], [0], [0], [1], [0, 0, 1, 1], [], []>} : vector<72x8xbf16>, vector<8x8xbf16>, vector<72x8xf32> -> vector<72x8xf32>
    %51 = arith.addf %45, %50 : vector<72x8xf32>
    %c0_44 = arith.constant 0 : index
    %c10 = arith.constant 10 : index
    %c0_45 = arith.constant 0 : index
    %52 = vector.load %arg3[%c0_44, %c10, %c0_45] : memref<1x360x8xbf16, #tpu.memory_space<vmem>>, vector<1x72x8xbf16>
    %53 = vector.shape_cast %52 : vector<1x72x8xbf16> to vector<72x8xbf16>
    %c8 = arith.constant 8 : index
    %c0_46 = arith.constant 0 : index
    %c0_47 = arith.constant 0 : index
    %54 = vector.load %arg4[%c8, %c0_46, %c0_47] : memref<9x8x8xbf16, #tpu.memory_space<vmem>>, vector<1x8x8xbf16>
    %55 = vector.shape_cast %54 : vector<1x8x8xbf16> to vector<8x8xbf16>
    %cst_48 = arith.constant dense<0.000000e+00> : vector<72x8xf32>
    %56 = tpu.matmul %53, %55, %cst_48 {dimension_numbers = #tpu.dot_dimension_numbers<[1], [0], [0], [1], [0, 0, 1, 1], [], []>} : vector<72x8xbf16>, vector<8x8xbf16>, vector<72x8xf32> -> vector<72x8xf32>
    %57 = arith.addf %51, %56 : vector<72x8xf32>
    %c0_49 = arith.constant 0 : index
    %c0_50 = arith.constant 0 : index
    %58 = vector.load %arg7[%c0_49, %c0_50] : memref<72x8xf32, #tpu.memory_space<vmem>>, vector<72x8xf32>
    tpu.vector_store %arg7[%c0_49, %c0_50], %57 {strides = array<i32>} : memref<72x8xf32, #tpu.memory_space<vmem>>, vector<72x8xf32>,
    %c0_i32_51 = arith.constant 0 : i32
    %59 = arith.cmpi eq, %arg2, %c0_i32_51 : i32
    %60 = arith.extui %59 : i1 to i32
    %c0_i32_52 = arith.constant 0 : i32
    %61 = arith.cmpi ne, %60, %c0_i32_52 : i32
    scf.if %61 {
      %c0_53 = arith.constant 0 : index
      %c0_54 = arith.constant 0 : index
      %62 = vector.load %arg5[%c0_53, %c0_54] : memref<1x8xf32, #tpu.memory_space<vmem>>, vector<1x8xf32>
      %63 = vector.broadcast %62 : vector<1x8xf32> to vector<72x8xf32>
      %64 = arith.addf %57, %63 : vector<72x8xf32>
      %cst_55 = arith.constant 0.000000e+00 : f32
      %65 = vector.broadcast %cst_55 : f32 to vector<72x8xf32>
      %66 = arith.maximumf %64, %65 : vector<72x8xf32>
      %67 = arith.truncf %66 : vector<72x8xf32> to vector<72x8xbf16>
      %c0_56 = arith.constant 0 : index
      %c0_57 = arith.constant 0 : index
      %c0_58 = arith.constant 0 : index
      %68 = vector.load %arg6[%c0_56, %c0_57, %c0_58] : memref<1x72x8xbf16, #tpu.memory_space<vmem>>, vector<1x72x8xbf16>
      %69 = vector.shape_cast %68 : vector<1x72x8xbf16> to vector<72x8xbf16>
      %70 = vector.shape_cast %67 : vector<72x8xbf16> to vector<1x72x8xbf16>
      tpu.vector_store %arg6[%c0_56, %c0_57, %c0_58], %70 {strides = array<i32>} : memref<1x72x8xbf16, #tpu.memory_space<vmem>>, vector<1x72x8xbf16>,
    } else {
    }
    return
  }
  func.func @transform_0(%arg0: i32, %arg1: i32, %arg2: i32) -> (i32, i32, i32) {
    %c0_i32 = arith.constant 0 : i32
    %c0_i32_0 = arith.constant 0 : i32
    return %arg0, %c0_i32, %arg2 : i32, i32, i32
  }
  func.func @transform_1(%arg0: i32, %arg1: i32, %arg2: i32) -> (i32, i32, i32) {
    %c0_i32 = arith.constant 0 : i32
    %c0_i32_0 = arith.constant 0 : i32
    return %c0_i32, %arg2, %arg1 : i32, i32, i32
  }
  func.func @transform_2(%arg0: i32, %arg1: i32, %arg2: i32) -> (i32, i32) {
    %c0_i32 = arith.constant 0 : i32
    %c0_i32_0 = arith.constant 0 : i32
    return %c0_i32, %arg1 : i32, i32
  }
  func.func @transform_3(%arg0: i32, %arg1: i32, %arg2: i32) -> (i32, i32, i32) {
    %c0_i32 = arith.constant 0 : i32
    %c0_i32_0 = arith.constant 0 : i32
    return %arg0, %c0_i32, %arg1 : i32, i32, i32
  }
}

</mosaic_0001>

<llo_original>
// kernel: tpu_custom_call.1
$region0: #{tpu_custom_call.1}
  #allocation0 [shape = 'u32[]', space=smem, size = 0x4, offset = 0x4, fixed_abs, tag = 'smem constant byte address 0x4 - core index']
  #allocation1 [shape = 'u32[72,128]{1,0:T(1,128)}', space=vmem, size = 0x9000, scoped, tag = 'internal scratch']
  #allocation2 [shape = 'f32[72,8]{1,0:T(8,128)}', space=vmem, size = 0x9000, scoped, tag = 'scratch operand']
  %s0 = inlined_call_operand.vmem [shape: bf16[2,360,8], index: 0, kind: input, shape index: {}]
  %s1 = inlined_call_operand.vmem [shape: bf16[9,8,8], index: 1, kind: input, shape index: {}]
  %s2 = inlined_call_operand.vmem [shape: f32[1,8], index: 2, kind: input, shape index: {}]
  %s3 = inlined_call_operand.vmem [shape: bf16[2,72,8], index: 3, kind: output, shape index: {}]
  %s4 = sld [smem:[#allocation0]]
  $region53: #{tpu_custom_call.1} parent=0
    _
  %s6 = ssub.s32 1, %s4
  %s7 = scalar_select 0, %s6, %s4
  loop: start=0, step=1, limit=4
  $region2: #{tpu_custom_call.1} parent=0 // loop_pre_header
    _
  $region3: #{tpu_custom_call.1} parent=0 // loop_header
    %s9 = sphi 0, %s13
    %p10 = scmp.ge.s32.totalorder %s9, 4
    %s16 = sphi 0, %s35
    %s17 = sphi 0, %s31
    %s18 = sphi 0, %s27
    %s19 = sphi 0, %s16
    %s20 = sphi 0, %s17
    %s21 = sphi 0, %s18
    %s22 = sphi 0, %s19
    %s23 = sphi 0, %s20
    %s24 = sphi 0, %s21
    %s40 = sphi 0, %s42
    %s43 = sphi 0, %s40
    %s44 = sphi 0, %s43
    %s60 = sphi 0, %s44
    %s68 = sphi 0, %s70
    %s71 = sphi 0, %s68
    %s72 = sphi 0, %s71
    %s88 = sphi 0, %s72
    %s94 = sphi 0, %s96
    %s97 = sphi 0, %s94
    %s98 = sphi 0, %s97
    %s114 = sphi 0, %s98
    %s122 = sphi 0, %s124
    %s125 = sphi 0, %s122
    %s126 = sphi 0, %s125
    %s142 = sphi 0, %s126
  $region4: #{tpu_custom_call.1} parent=0 // loop_header_branch
    %12 = sbr.rel (%p10) target = $region8
  $region5: #{tpu_custom_call.1} parent=0 // loop_body
    %s14 = ssub.s32 %s9, 1
    %s15 = ssub.s32 %s9, 2
    %s25 = sadd.s32 1, %s18
    %p26 = scmp.ge.s32.totalorder %s25, 1
    %s27 = scalar_select %p26, 0, %s25
    %s28 = sadd.s32 1, %s17
    %s29 = scalar_select %p26, %s28, %s17
    %p30 = scmp.ge.s32.totalorder %s29, 1
    %s31 = scalar_select %p30, 0, %s29
    %s32 = sadd.s32 1, %s16
    %s33 = scalar_select %p30, %s32, %s16
    %p34 = scmp.ge.s32.totalorder %s33, 2
    %s35 = scalar_select %p34, 0, %s33
    %s36 = ssub.s32 %s16, %s35
    %s37 = ssub.s32 %s18, %s27
    %s38 = sor.u32 %s36, %s37
    %p39 = scmp.eq.s32.totalorder %s38, 0
    %s41 = sadd.s32 %s40, 1
    %s42 = scalar_select %p39, %s40, %s41
    %p45 = pneg %p39
    %p46 = scmp.eq.s32.totalorder %s9, 1
    %p47 = por %p45, %p46
    %p48 = scmp.ne.s32.totalorder %s40, %s43
    %p49 = scmp.eq.s32.totalorder %s9, 0
    %p50 = por %p48, %p49
    %p51 = scmp.ne.s32.totalorder %s40, %s43
    %p52 = scmp.eq.s32.totalorder %s14, 1
    %p53 = por %p51, %p52
    %p54 = scmp.ne.s32.totalorder %s43, %s44
    %p55 = scmp.eq.s32.totalorder %s14, 0
    %p56 = por %p54, %p55
    %p57 = scmp.ne.s32.totalorder %s43, %s44
    %p58 = scmp.eq.s32.totalorder %s15, 1
    %p59 = por %p57, %p58
    %p61 = scmp.ne.s32.totalorder %s44, %s60
    %p62 = scmp.eq.s32.totalorder %s15, 0
    %p63 = por %p61, %p62
    %s64 = ssub.s32 %s18, %s27
    %s65 = ssub.s32 %s17, %s31
    %s66 = sor.u32 %s64, %s65
    %p67 = scmp.eq.s32.totalorder %s66, 0
    %s69 = sadd.s32 %s68, 1
    %s70 = scalar_select %p67, %s68, %s69
    %p73 = pneg %p67
    %p74 = scmp.eq.s32.totalorder %s9, 1
    %p75 = por %p73, %p74
    %p76 = scmp.ne.s32.totalorder %s68, %s71
    %p77 = scmp.eq.s32.totalorder %s9, 0
    %p78 = por %p76, %p77
    %p79 = scmp.ne.s32.totalorder %s68, %s71
    %p80 = scmp.eq.s32.totalorder %s14, 1
    %p81 = por %p79, %p80
    %p82 = scmp.ne.s32.totalorder %s71, %s72
    %p83 = scmp.eq.s32.totalorder %s14, 0
    %p84 = por %p82, %p83
    %p85 = scmp.ne.s32.totalorder %s71, %s72
    %p86 = scmp.eq.s32.totalorder %s15, 1
    %p87 = por %p85, %p86
    %p89 = scmp.ne.s32.totalorder %s72, %s88
    %p90 = scmp.eq.s32.totalorder %s15, 0
    %p91 = por %p89, %p90
    %s92 = ssub.s32 %s17, %s31
    %p93 = scmp.eq.s32.totalorder %s92, 0
    %s95 = sadd.s32 %s94, 1
    %s96 = scalar_select %p93, %s94, %s95
    %p99 = pneg %p93
    %p100 = scmp.eq.s32.totalorder %s9, 1
    %p101 = por %p99, %p100
    %p102 = scmp.ne.s32.totalorder %s94, %s97
    %p103 = scmp.eq.s32.totalorder %s9, 0
    %p104 = por %p102, %p103
    %p105 = scmp.ne.s32.totalorder %s94, %s97
    %p106 = scmp.eq.s32.totalorder %s14, 1
    %p107 = por %p105, %p106
    %p108 = scmp.ne.s32.totalorder %s97, %s98
    %p109 = scmp.eq.s32.totalorder %s14, 0
    %p110 = por %p108, %p109
    %p111 = scmp.ne.s32.totalorder %s97, %s98
    %p112 = scmp.eq.s32.totalorder %s15, 1
    %p113 = por %p111, %p112
    %p115 = scmp.ne.s32.totalorder %s98, %s114
    %p116 = scmp.eq.s32.totalorder %s15, 0
    %p117 = por %p115, %p116
    %s118 = ssub.s32 %s16, %s35
    %s119 = ssub.s32 %s17, %s31
    %s120 = sor.u32 %s118, %s119
    %p121 = scmp.eq.s32.totalorder %s120, 0
    %s123 = sadd.s32 %s122, 1
    %s124 = scalar_select %p121, %s122, %s123
    %p127 = pneg %p121
    %p128 = scmp.eq.s32.totalorder %s9, 1
    %p129 = por %p127, %p128
    %p130 = scmp.ne.s32.totalorder %s122, %s125
    %p131 = scmp.eq.s32.totalorder %s9, 0
    %p132 = por %p130, %p131
    %p133 = scmp.ne.s32.totalorder %s122, %s125
    %p134 = scmp.eq.s32.totalorder %s14, 1
    %p135 = por %p133, %p134
    %p136 = scmp.ne.s32.totalorder %s125, %s126
    %p137 = scmp.eq.s32.totalorder %s14, 0
    %p138 = por %p136, %p137
    %p139 = scmp.ne.s32.totalorder %s125, %s126
    %p140 = scmp.eq.s32.totalorder %s15, 1
    %p141 = por %p139, %p140
    %p143 = scmp.ne.s32.totalorder %s126, %s142
    %p144 = scmp.eq.s32.totalorder %s15, 0
    %p145 = por %p143, %p144
    %p146 = scmp.le.s32.totalorder 1, %s9
    %p147 = scmp.lt.s32.totalorder %s9, 3
    %p148 = pnand %p146, %p147
    %p149 = pneg %p148
    // Predicated region
    $region9: #{tpu_custom_call.1} parent=5 // pred_check
      _
    $region10: #{tpu_custom_call.1} parent=5 // pred_check_branch
      %151 = sbr.rel (%p148) target = $region12
    $region11: #{tpu_custom_call.1} parent=5 // pred_region
      %s152 = ssub.s32 %s9, 1
      // Predicated region
      $region13: #{tpu_custom_call.1} parent=11 // pred_check
        %p153 = pneg %p84
      $region14: #{tpu_custom_call.1} parent=11 // pred_check_branch
        %155 = sbr.rel (%p153) target = $region16
      $region15: #{tpu_custom_call.1} parent=11 // pred_region
        %p156 = scmp.lt.s32.totalorder %s21, 0
        %s157 = scalar_select %p156, %s21, 0
        %p158 = scmp.lt.s32.totalorder %s20, 0
        %s159 = scalar_select %p158, %s20, 0
        %s160 = sadd.s32 %s159, %s157
        %s161 = smul.addr %s160, 4
        %s162 = scalar_lea.vmem %s1, %s161
      $region16: #{tpu_custom_call.1} parent=11 // pred_fallthru
        _
      // Predicated region
      $region17: #{tpu_custom_call.1} parent=11 // pred_check
        %p163 = pneg %p110
      $region18: #{tpu_custom_call.1} parent=11 // pred_check_branch
        %165 = sbr.rel (%p163) target = $region20
      $region19: #{tpu_custom_call.1} parent=11 // pred_region
        %p166 = scmp.lt.s32.totalorder %s20, 0
        %s167 = scalar_select %p166, %s20, 0
        %s168 = scalar_lea.vmem %s2, %s167
      $region20: #{tpu_custom_call.1} parent=11 // pred_fallthru
        _
    $region12: #{tpu_custom_call.1} parent=5 // pred_fallthru
      _
    %p169 = scmp.lt.s32.totalorder %s9, 2
    // Predicated region
    $region21: #{tpu_custom_call.1} parent=5 // pred_check
      %p170 = pneg %p169
    $region22: #{tpu_custom_call.1} parent=5 // pred_check_branch
      %172 = sbr.rel (%p170) target = $region24
    $region23: #{tpu_custom_call.1} parent=5 // pred_region
      // Predicated region
      $region25: #{tpu_custom_call.1} parent=23 // pred_check
        %p173 = pneg %p50
      $region26: #{tpu_custom_call.1} parent=23 // pred_check_branch
        %175 = sbr.rel (%p173) target = $region28
      $region27: #{tpu_custom_call.1} parent=23 // pred_region
        %p176 = scmp.lt.s32.totalorder %s16, 1
        %s177 = scalar_select %p176, %s16, 1
        %p178 = scmp.lt.s32.totalorder %s18, 0
        %s179 = scalar_select %p178, %s18, 0
        %s180 = smul.addr %s177, 45
        %s181 = sadd.s32 %s179, %s180
        %s182 = smul.addr %s181, 4
        %s183 = scalar_lea.vmem %s0, %s182
      $region28: #{tpu_custom_call.1} parent=23 // pred_fallthru
        _
    $region24: #{tpu_custom_call.1} parent=5 // pred_fallthru
      _
    %p184 = scmp.le.s32.totalorder 1, %s9
    %p185 = scmp.lt.s32.totalorder %s9, 3
    %p186 = pnand %p184, %p185
    %p187 = pneg %p186
    // Predicated region
    $region29: #{tpu_custom_call.1} parent=5 // pred_check
      _
    $region30: #{tpu_custom_call.1} parent=5 // pred_check_branch
      %189 = sbr.rel (%p186) target = $region32
    $region31: #{tpu_custom_call.1} parent=5 // pred_region
      %s190 = ssub.s32 %s9, 1
      %p191 = scmp.lt.s32.totalorder %s19, 1
      %s192 = scalar_select %p191, %s19, 1
      %p193 = scmp.lt.s32.totalorder %s21, 0
      %s194 = scalar_select %p193, %s21, 0
      %s195 = smul.addr %s192, 45
      %s196 = sadd.s32 %s194, %s195
      %s197 = smul.addr %s196, 4
      %s198 = scalar_lea.vmem %s0, %s197
      %p199 = pneg %p56
      %p200 = pneg %p53
      %p201 = scmp.lt.s32.totalorder %s21, 0
      %s202 = scalar_select %p201, %s21, 0
      %p203 = scmp.lt.s32.totalorder %s20, 0
      %s204 = scalar_select %p203, %s20, 0
      %s205 = sadd.s32 %s204, %s202
      %s206 = smul.addr %s205, 4
      %s207 = scalar_lea.vmem %s1, %s206
      %p208 = pneg %p84
      %p209 = pneg %p81
      %p210 = scmp.lt.s32.totalorder %s20, 0
      %s211 = scalar_select %p210, %s20, 0
      %s212 = scalar_lea.vmem %s2, %s211
      %p213 = pneg %p110
      %p214 = pneg %p107
      %p215 = pneg %p138
      %p216 = pneg %p135
      %p217 = scmp.lt.s32.totalorder %s19, 1
      %s218 = scalar_select %p217, %s19, 1
      %p219 = scmp.lt.s32.totalorder %s20, 0
      %s220 = scalar_select %p219, %s20, 0
      %s221 = smul.addr %s218, 9
      %s222 = sadd.s32 %s220, %s221
      %s223 = smul.addr %s222, 4
      %s224 = scalar_lea.vmem %s3, %s223
      %p225 = scmp.lt.s32.totalorder %s19, 1
      %s226 = scalar_select %p225, %s19, 1
      %p227 = scmp.lt.s32.totalorder %s21, 0
      %s228 = scalar_select %p227, %s21, 0
      %s229 = smul.addr %s226, 45
      %s230 = sadd.s32 %s228, %s229
      %s231 = smul.addr %s230, 4
      %s232 = scalar_lea.vmem %s0, %s231
      %p233 = scmp.lt.s32.totalorder %s21, 0
      %s234 = scalar_select %p233, %s21, 0
      %p235 = scmp.lt.s32.totalorder %s20, 0
      %s236 = scalar_select %p235, %s20, 0
      %s237 = sadd.s32 %s236, %s234
      %s238 = smul.addr %s237, 4
      %s239 = scalar_lea.vmem %s1, %s238
      %p240 = scmp.lt.s32.totalorder %s20, 0
      %s241 = scalar_select %p240, %s20, 0
      %s242 = scalar_lea.vmem %s2, %s241
      %p243 = scmp.lt.s32.totalorder %s19, 1
      %s244 = scalar_select %p243, %s19, 1
      %p245 = scmp.lt.s32.totalorder %s20, 0
      %s246 = scalar_select %p245, %s20, 0
      %s247 = smul.addr %s244, 9
      %s248 = sadd.s32 %s246, %s247
      %s249 = smul.addr %s248, 4
      %s250 = scalar_lea.vmem %s3, %s249
      %p252 = scmp.eq.s32.totalorder %s21, 0
      // Predicated region
      $region33: #{tpu_custom_call.1} parent=31 // pred_check
        %p253 = pneg %p252
      $region34: #{tpu_custom_call.1} parent=31 // pred_check_branch
        %255 = sbr.rel (%p253) target = $region36
      $region35: #{tpu_custom_call.1} parent=31 // pred_region
        %vm256 = vcmask 64512
        %257 = vst.msk [vmem:[#allocation2] sm:$0xff] %vm256, 0.0
        %258 = vst.msk [vmem:[#allocation2 + $0x8] sm:$0xff] %vm256, 0.0
        %259 = vst.msk [vmem:[#allocation2 + $0x10] sm:$0xff] %vm256, 0.0
        %260 = vst.msk [vmem:[#allocation2 + $0x18] sm:$0xff] %vm256, 0.0
        %261 = vst.msk [vmem:[#allocation2 + $0x20] sm:$0xff] %vm256, 0.0
        %262 = vst.msk [vmem:[#allocation2 + $0x28] sm:$0xff] %vm256, 0.0
        %263 = vst.msk [vmem:[#allocation2 + $0x30] sm:$0xff] %vm256, 0.0
        %264 = vst.msk [vmem:[#allocation2 + $0x38] sm:$0xff] %vm256, 0.0
        %265 = vst.msk [vmem:[#allocation2 + $0x40] sm:$0xff] %vm256, 0.0
      $region36: #{tpu_custom_call.1} parent=31 // pred_fallthru
        _
      %v266 = vld [vmem:[#allocation2] sm:$0xff]
      %v267 = vld [vmem:[#allocation2 + $0x8] sm:$0xff]
      %v268 = vld [vmem:[#allocation2 + $0x10] sm:$0xff]
      %v269 = vld [vmem:[#allocation2 + $0x18] sm:$0xff]
      %v270 = vld [vmem:[#allocation2 + $0x20] sm:$0xff]
      %v271 = vld [vmem:[#allocation2 + $0x28] sm:$0xff]
      %v272 = vld [vmem:[#allocation2 + $0x30] sm:$0xff]
      %v273 = vld [vmem:[#allocation2 + $0x38] sm:$0xff]
      %v274 = vld [vmem:[#allocation2 + $0x40] sm:$0xff]
      %v275 = vld [vmem:[%s232] sm:$0xf]
      %v276 = vld [vmem:[%s232 + $0x4] sm:$0xf]
      %v277 = vld [vmem:[%s232 + $0x8] sm:$0xf]
      %v278 = vld [vmem:[%s232 + $0xc] sm:$0xf]
      %v279 = vld [vmem:[%s232 + $0x10] sm:$0xf]
      %v280 = vld [vmem:[%s232 + $0x14] sm:$0xf]
      %v281 = vld [vmem:[%s232 + $0x18] sm:$0xf]
      %v282 = vld [vmem:[%s232 + $0x1c] sm:$0xf]
      %v283 = vld [vmem:[%s232 + $0x20] sm:$0xf]
      %v284 = vld [vmem:[%s239] sm:$0xf]
      %v294 = vunpack.c.l.b16 %v275
      %v295 = vunpack.c.l.b16 %v276
      %v296 = vunpack.c.l.b16 %v277
      %v297 = vunpack.c.l.b16 %v278
      %v298 = vunpack.c.l.b16 %v279
      %v299 = vunpack.c.l.b16 %v280
      %v300 = vunpack.c.l.b16 %v281
      %v301 = vunpack.c.l.b16 %v282
      %v302 = vunpack.c.l.b16 %v283
      %v303 = vpack.c.b16 %v295, %v294
      %v304 = vpack.c.b16 %v297, %v296
      %v305 = vpack.c.b16 %v299, %v298
      %v306 = vpack.c.b16 %v301, %v300
      %v307 = vpack.c.b16 %v302, %v302
      %vm308 = vcmask 64512
      %v310 = vsel %vm308, %v303, 0
      %v313 = vsel %vm308, %v304, 0
      %v316 = vsel %vm308, %v305, 0
      %v319 = vsel %vm308, %v306, 0
      %v322 = vsel %vm308, %v307, 0
      %vm324 = vcmask 1043456
      %v326 = vsel %vm324, %v284, 0
      %328 = vmatpush.bf16.msra.mxu0 0
      %329 = vmatpush.bf16.msra.mxu0 0
      %330 = vmatpush.bf16.msra.mxu0 0
      %331 = vmatpush.bf16.msra.mxu0 0
      %332 = vmatpush.bf16.msra.mxu0 0
      %333 = vmatpush.bf16.msra.mxu0 0
      %334 = vmatpush.bf16.msra.mxu0 0
      %335 = vmatpush.bf16.msra.mxu0 %v326
      %336 = vmatmul.bf16.gmra.mxu0 %v310
      %v337 = vpop.f32.mrf.mxu0
      %v338 = vadd.f32 0.0, %v337
      %v339 = vpop.f32.mrf.mxu0
      %v340 = vadd.f32 0.0, %v339
      %341 = vmatmul.bf16.gmra.mxu0 %v313
      %v342 = vpop.f32.mrf.mxu0
      %v343 = vadd.f32 0.0, %v342
      %v344 = vpop.f32.mrf.mxu0
      %v345 = vadd.f32 0.0, %v344
      %346 = vmatmul.bf16.gmra.mxu0 %v316
      %v347 = vpop.f32.mrf.mxu0
      %v348 = vadd.f32 0.0, %v347
      %v349 = vpop.f32.mrf.mxu0
      %v350 = vadd.f32 0.0, %v349
      %351 = vmatmul.bf16.gmra.mxu0 %v319
      %v352 = vpop.f32.mrf.mxu0
      %v353 = vadd.f32 0.0, %v352
      %v354 = vpop.f32.mrf.mxu0
      %v355 = vadd.f32 0.0, %v354
      %356 = vmatmul.bf16.gmra.mxu0 %v322
      %v357 = vpop.f32.mrf.mxu0
      %v358 = vadd.f32 0.0, %v357
      %v359 = vpop.f32.mrf.mxu0
      %360 = vdwg.mxu0
      %v361 = vadd.f32 %v266, %v338
      %v362 = vadd.f32 %v267, %v340
      %v363 = vadd.f32 %v268, %v343
      %v364 = vadd.f32 %v269, %v345
      %v365 = vadd.f32 %v270, %v348
      %v366 = vadd.f32 %v271, %v350
      %v367 = vadd.f32 %v272, %v353
      %v368 = vadd.f32 %v273, %v355
      %v369 = vadd.f32 %v274, %v358
      %v370 = vld [vmem:[%s232 + $0x2c] sm:$0xe]
      %v371 = vld [vmem:[%s232 + $0x30] sm:$0xf]
      %v372 = vld [vmem:[%s232 + $0x34] sm:$0xf]
      %v373 = vld [vmem:[%s232 + $0x38] sm:$0xf]
      %v374 = vld [vmem:[%s232 + $0x3c] sm:$0xf]
      %v375 = vld [vmem:[%s232 + $0x40] sm:$0xf]
      %v376 = vld [vmem:[%s232 + $0x44] sm:$0xf]
      %v377 = vld [vmem:[%s232 + $0x48] sm:$0xf]
      %v378 = vld [vmem:[%s232 + $0x4c] sm:$0xf]
      %v379 = vld [vmem:[%s232 + $0x50] sm:$0x1]
      %s380 = scalar_lea.vmem %s239, 4
      %v381 = vld [vmem:[%s380] sm:$0xf]
      %v392 = vunpack.c.l.b16 %v370
      %v393 = vunpack.c.l.b16 %v371
      %v394 = vunpack.c.l.b16 %v372
      %v395 = vunpack.c.l.b16 %v373
      %v396 = vunpack.c.l.b16 %v374
      %v397 = vunpack.c.l.b16 %v375
      %v398 = vunpack.c.l.b16 %v376
      %v399 = vunpack.c.l.b16 %v377
      %v400 = vunpack.c.l.b16 %v378
      %v401 = vunpack.c.l.b16 %v379
      %v402 = vpack.c.b16 %v393, %v392
      %v403 = vpack.c.b16 %v395, %v394
      %v404 = vpack.c.b16 %v397, %v396
      %v405 = vpack.c.b16 %v399, %v398
      %v406 = vpack.c.b16 %v401, %v400
      %vm407 = vcmask 1046528
      %v408 = vrot.slane %v402, 1
      %v409 = vrot.slane %v403, 1
      %v410 = vsel %vm407, %v408, %v409
      %v411 = vrot.slane %v404, 1
      %v412 = vsel %vm407, %v409, %v411
      %v413 = vrot.slane %v405, 1
      %v414 = vsel %vm407, %v411, %v413
      %v415 = vrot.slane %v406, 1
      %v416 = vsel %vm407, %v413, %v415
      %v418 = vsel %vm308, %v410, 0
      %v421 = vsel %vm308, %v412, 0
      %v424 = vsel %vm308, %v414, 0
      %v427 = vsel %vm308, %v416, 0
      %v430 = vsel %vm308, %v415, 0
      %v433 = vsel %vm324, %v381, 0
      %435 = vmatpush.bf16.msra.mxu0 0
      %436 = vmatpush.bf16.msra.mxu0 0
      %437 = vmatpush.bf16.msra.mxu0 0
      %438 = vmatpush.bf16.msra.mxu0 0
      %439 = vmatpush.bf16.msra.mxu0 0
      %440 = vmatpush.bf16.msra.mxu0 0
      %441 = vmatpush.bf16.msra.mxu0 0
      %442 = vmatpush.bf16.msra.mxu0 %v433
      %443 = vmatmul.bf16.gmra.mxu0 %v418
      %v444 = vpop.f32.mrf.mxu0
      %v445 = vadd.f32 0.0, %v444
      %v446 = vpop.f32.mrf.mxu0
      %v447 = vadd.f32 0.0, %v446
      %448 = vmatmul.bf16.gmra.mxu0 %v421
      %v449 = vpop.f32.mrf.mxu0
      %v450 = vadd.f32 0.0, %v449
      %v451 = vpop.f32.mrf.mxu0
      %v452 = vadd.f32 0.0, %v451
      %453 = vmatmul.bf16.gmra.mxu0 %v424
      %v454 = vpop.f32.mrf.mxu0
      %v455 = vadd.f32 0.0, %v454
      %v456 = vpop.f32.mrf.mxu0
      %v457 = vadd.f32 0.0, %v456
      %458 = vmatmul.bf16.gmra.mxu0 %v427
      %v459 = vpop.f32.mrf.mxu0
      %v460 = vadd.f32 0.0, %v459
      %v461 = vpop.f32.mrf.mxu0
      %v462 = vadd.f32 0.0, %v461
      %463 = vmatmul.bf16.gmra.mxu0 %v430
      %v464 = vpop.f32.mrf.mxu0
      %v465 = vadd.f32 0.0, %v464
      %v466 = vpop.f32.mrf.mxu0
      %467 = vdwg.mxu0
      %v468 = vadd.f32 %v361, %v445
      %v469 = vadd.f32 %v362, %v447
      %v470 = vadd.f32 %v363, %v450
      %v471 = vadd.f32 %v364, %v452
      %v472 = vadd.f32 %v365, %v455
      %v473 = vadd.f32 %v366, %v457
      %v474 = vadd.f32 %v367, %v460
      %v475 = vadd.f32 %v368, %v462
      %v476 = vadd.f32 %v369, %v465
      %v477 = vld [vmem:[%s232] sm:$0xf]
      %v478 = vld [vmem:[%s232 + $0x4] sm:$0xf]
      %v479 = vld [vmem:[%s232 + $0x8] sm:$0xf]
      %v480 = vld [vmem:[%s232 + $0xc] sm:$0xf]
      %v481 = vld [vmem:[%s232 + $0x10] sm:$0xf]
      %v482 = vld [vmem:[%s232 + $0x14] sm:$0xf]
      %v483 = vld [vmem:[%s232 + $0x18] sm:$0xf]
      %v484 = vld [vmem:[%s232 + $0x1c] sm:$0xf]
      %v485 = vld [vmem:[%s232 + $0x20] sm:$0xf]
      %v486 = vld [vmem:[%s232 + $0x24] sm:$0x1]
      %s487 = scalar_lea.vmem %s239, 8
      %v488 = vld [vmem:[%s487] sm:$0xf]
      %v499 = vunpack.c.l.b16 %v477
      %v500 = vunpack.c.l.b16 %v478
      %v501 = vunpack.c.l.b16 %v479
      %v502 = vunpack.c.l.b16 %v480
      %v503 = vunpack.c.l.b16 %v481
      %v504 = vunpack.c.l.b16 %v482
      %v505 = vunpack.c.l.b16 %v483
      %v506 = vunpack.c.l.b16 %v484
      %v507 = vunpack.c.l.b16 %v485
      %v508 = vunpack.c.l.b16 %v486
      %v509 = vpack.c.b16 %v500, %v499
      %v510 = vpack.c.b16 %v502, %v501
      %v511 = vpack.c.b16 %v504, %v503
      %v512 = vpack.c.b16 %v506, %v505
      %v513 = vpack.c.b16 %v508, %v507
      %vm514 = vsmask.f32 7424
      %v516 = vshrl.u32 %v509, 16
      %v518 = vshll.u32 %v509, 16
      %v520 = vrot.slane %v518, 1
      %v521 = vor.u32 %v516, %v520
      %v523 = vshll.u32 %v510, 16
      %v525 = vrot.slane %v523, 1
      %v526 = vsel %vm514, %v521, %v525
      %v527 = vshrl.u32 %v510, 16
      %v529 = vor.u32 %v527, %v525
      %v531 = vshll.u32 %v511, 16
      %v533 = vrot.slane %v531, 1
      %v534 = vsel %vm514, %v529, %v533
      %v535 = vshrl.u32 %v511, 16
      %v537 = vor.u32 %v535, %v533
      %v539 = vshll.u32 %v512, 16
      %v541 = vrot.slane %v539, 1
      %v542 = vsel %vm514, %v537, %v541
      %v543 = vshrl.u32 %v512, 16
      %v545 = vor.u32 %v543, %v541
      %v547 = vshll.u32 %v513, 16
      %v549 = vrot.slane %v547, 1
      %v550 = vsel %vm514, %v545, %v549
      %v551 = vshrl.u32 %v513, 16
      %v553 = vor.u32 %v551, %v549
      %v555 = vsel %vm308, %v526, 0
      %v558 = vsel %vm308, %v534, 0
      %v561 = vsel %vm308, %v542, 0
      %v564 = vsel %vm308, %v550, 0
      %v567 = vsel %vm308, %v553, 0
      %v570 = vsel %vm324, %v488, 0
      %572 = vmatpush.bf16.msra.mxu0 0
      %573 = vmatpush.bf16.msra.mxu0 0
      %574 = vmatpush.bf16.msra.mxu0 0
      %575 = vmatpush.bf16.msra.mxu0 0
      %576 = vmatpush.bf16.msra.mxu0 0
      %577 = vmatpush.bf16.msra.mxu0 0
      %578 = vmatpush.bf16.msra.mxu0 0
      %579 = vmatpush.bf16.msra.mxu0 %v570
      %580 = vmatmul.bf16.gmra.mxu0 %v555
      %v581 = vpop.f32.mrf.mxu0
      %v582 = vadd.f32 0.0, %v581
      %v583 = vpop.f32.mrf.mxu0
      %v584 = vadd.f32 0.0, %v583
      %585 = vmatmul.bf16.gmra.mxu0 %v558
      %v586 = vpop.f32.mrf.mxu0
      %v587 = vadd.f32 0.0, %v586
      %v588 = vpop.f32.mrf.mxu0
      %v589 = vadd.f32 0.0, %v588
      %590 = vmatmul.bf16.gmra.mxu0 %v561
      %v591 = vpop.f32.mrf.mxu0
      %v592 = vadd.f32 0.0, %v591
      %v593 = vpop.f32.mrf.mxu0
      %v594 = vadd.f32 0.0, %v593
      %595 = vmatmul.bf16.gmra.mxu0 %v564
      %v596 = vpop.f32.mrf.mxu0
      %v597 = vadd.f32 0.0, %v596
      %v598 = vpop.f32.mrf.mxu0
      %v599 = vadd.f32 0.0, %v598
      %600 = vmatmul.bf16.gmra.mxu0 %v567
      %v601 = vpop.f32.mrf.mxu0
      %v602 = vadd.f32 0.0, %v601
      %v603 = vpop.f32.mrf.mxu0
      %604 = vdwg.mxu0
      %v605 = vadd.f32 %v468, %v582
      %v606 = vadd.f32 %v469, %v584
      %v607 = vadd.f32 %v470, %v587
      %v608 = vadd.f32 %v471, %v589
      %v609 = vadd.f32 %v472, %v592
      %v610 = vadd.f32 %v473, %v594
      %v611 = vadd.f32 %v474, %v597
      %v612 = vadd.f32 %v475, %v599
      %v613 = vadd.f32 %v476, %v602
      %v614 = vld [vmem:[%s232 + $0x58] sm:$0xc]
      %v615 = vld [vmem:[%s232 + $0x5c] sm:$0xf]
      %v616 = vld [vmem:[%s232 + $0x60] sm:$0xf]
      %v617 = vld [vmem:[%s232 + $0x64] sm:$0xf]
      %v618 = vld [vmem:[%s232 + $0x68] sm:$0xf]
      %v619 = vld [vmem:[%s232 + $0x6c] sm:$0xf]
      %v620 = vld [vmem:[%s232 + $0x70] sm:$0xf]
      %v621 = vld [vmem:[%s232 + $0x74] sm:$0xf]
      %v622 = vld [vmem:[%s232 + $0x78] sm:$0xf]
      %v623 = vld [vmem:[%s232 + $0x7c] sm:$0x3]
      %s624 = scalar_lea.vmem %s239, 12
      %v625 = vld [vmem:[%s624] sm:$0xf]
      %v636 = vunpack.c.l.b16 %v614
      %v637 = vunpack.c.l.b16 %v615
      %v638 = vunpack.c.l.b16 %v616
      %v639 = vunpack.c.l.b16 %v617
      %v640 = vunpack.c.l.b16 %v618
      %v641 = vunpack.c.l.b16 %v619
      %v642 = vunpack.c.l.b16 %v620
      %v643 = vunpack.c.l.b16 %v621
      %v644 = vunpack.c.l.b16 %v622
      %v645 = vunpack.c.l.b16 %v623
      %v646 = vpack.c.b16 %v637, %v636
      %v647 = vpack.c.b16 %v639, %v638
      %v648 = vpack.c.b16 %v641, %v640
      %v649 = vpack.c.b16 %v643, %v642
      %v650 = vpack.c.b16 %v645, %v644
      %vm651 = vcmask 1045504
      %v652 = vrot.slane %v646, 2
      %v653 = vrot.slane %v647, 2
      %v654 = vsel %vm651, %v652, %v653
      %v655 = vrot.slane %v648, 2
      %v656 = vsel %vm651, %v653, %v655
      %v657 = vrot.slane %v649, 2
      %v658 = vsel %vm651, %v655, %v657
      %v659 = vrot.slane %v650, 2
      %v660 = vsel %vm651, %v657, %v659
      %v662 = vsel %vm308, %v654, 0
      %v665 = vsel %vm308, %v656, 0
      %v668 = vsel %vm308, %v658, 0
      %v671 = vsel %vm308, %v660, 0
      %v674 = vsel %vm308, %v659, 0
      %v677 = vsel %vm324, %v625, 0
      %679 = vmatpush.bf16.msra.mxu0 0
      %680 = vmatpush.bf16.msra.mxu0 0
      %681 = vmatpush.bf16.msra.mxu0 0
      %682 = vmatpush.bf16.msra.mxu0 0
      %683 = vmatpush.bf16.msra.mxu0 0
      %684 = vmatpush.bf16.msra.mxu0 0
      %685 = vmatpush.bf16.msra.mxu0 0
      %686 = vmatpush.bf16.msra.mxu0 %v677
      %687 = vmatmul.bf16.gmra.mxu0 %v662
      %v688 = vpop.f32.mrf.mxu0
      %v689 = vadd.f32 0.0, %v688
      %v690 = vpop.f32.mrf.mxu0
      %v691 = vadd.f32 0.0, %v690
      %692 = vmatmul.bf16.gmra.mxu0 %v665
      %v693 = vpop.f32.mrf.mxu0
      %v694 = vadd.f32 0.0, %v693
      %v695 = vpop.f32.mrf.mxu0
      %v696 = vadd.f32 0.0, %v695
      %697 = vmatmul.bf16.gmra.mxu0 %v668
      %v698 = vpop.f32.mrf.mxu0
      %v699 = vadd.f32 0.0, %v698
      %v700 = vpop.f32.mrf.mxu0
      %v701 = vadd.f32 0.0, %v700
      %702 = vmatmul.bf16.gmra.mxu0 %v671
      %v703 = vpop.f32.mrf.mxu0
      %v704 = vadd.f32 0.0, %v703
      %v705 = vpop.f32.mrf.mxu0
      %v706 = vadd.f32 0.0, %v705
      %707 = vmatmul.bf16.gmra.mxu0 %v674
      %v708 = vpop.f32.mrf.mxu0
      %v709 = vadd.f32 0.0, %v708
      %v710 = vpop.f32.mrf.mxu0
      %711 = vdwg.mxu0
      %v712 = vadd.f32 %v605, %v689
      %v713 = vadd.f32 %v606, %v691
      %v714 = vadd.f32 %v607, %v694
      %v715 = vadd.f32 %v608, %v696
      %v716 = vadd.f32 %v609, %v699
      %v717 = vadd.f32 %v610, %v701
      %v718 = vadd.f32 %v611, %v704
      %v719 = vadd.f32 %v612, %v706
      %v720 = vadd.f32 %v613, %v709
      %v721 = vld [vmem:[%s232 + $0x84] sm:$0x8]
      %v722 = vld [vmem:[%s232 + $0x88] sm:$0xf]
      %v723 = vld [vmem:[%s232 + $0x8c] sm:$0xf]
      %v724 = vld [vmem:[%s232 + $0x90] sm:$0xf]
      %v725 = vld [vmem:[%s232 + $0x94] sm:$0xf]
      %v726 = vld [vmem:[%s232 + $0x98] sm:$0xf]
      %v727 = vld [vmem:[%s232 + $0x9c] sm:$0xf]
      %v728 = vld [vmem:[%s232 + $0xa0] sm:$0xf]
      %v729 = vld [vmem:[%s232 + $0xa4] sm:$0xf]
      %v730 = vld [vmem:[%s232 + $0xa8] sm:$0x7]
      %s731 = scalar_lea.vmem %s239, 16
      %v732 = vld [vmem:[%s731] sm:$0xf]
      %v743 = vunpack.c.l.b16 %v721
      %v744 = vunpack.c.l.b16 %v722
      %v745 = vunpack.c.l.b16 %v723
      %v746 = vunpack.c.l.b16 %v724
      %v747 = vunpack.c.l.b16 %v725
      %v748 = vunpack.c.l.b16 %v726
      %v749 = vunpack.c.l.b16 %v727
      %v750 = vunpack.c.l.b16 %v728
      %v751 = vunpack.c.l.b16 %v729
      %v752 = vunpack.c.l.b16 %v730
      %v753 = vpack.c.b16 %v744, %v743
      %v754 = vpack.c.b16 %v746, %v745
      %v755 = vpack.c.b16 %v748, %v747
      %v756 = vpack.c.b16 %v750, %v749
      %v757 = vpack.c.b16 %v752, %v751
      %vm758 = vcmask 1044480
      %v759 = vrot.slane %v753, 3
      %v760 = vrot.slane %v754, 3
      %v761 = vsel %vm758, %v759, %v760
      %v762 = vrot.slane %v755, 3
      %v763 = vsel %vm758, %v760, %v762
      %v764 = vrot.slane %v756, 3
      %v765 = vsel %vm758, %v762, %v764
      %v766 = vrot.slane %v757, 3
      %v767 = vsel %vm758, %v764, %v766
      %v769 = vsel %vm308, %v761, 0
      %v772 = vsel %vm308, %v763, 0
      %v775 = vsel %vm308, %v765, 0
      %v778 = vsel %vm308, %v767, 0
      %v781 = vsel %vm308, %v766, 0
      %v784 = vsel %vm324, %v732, 0
      %786 = vmatpush.bf16.msra.mxu0 0
      %787 = vmatpush.bf16.msra.mxu0 0
      %788 = vmatpush.bf16.msra.mxu0 0
      %789 = vmatpush.bf16.msra.mxu0 0
      %790 = vmatpush.bf16.msra.mxu0 0
      %791 = vmatpush.bf16.msra.mxu0 0
      %792 = vmatpush.bf16.msra.mxu0 0
      %793 = vmatpush.bf16.msra.mxu0 %v784
      %794 = vmatmul.bf16.gmra.mxu0 %v769
      %v795 = vpop.f32.mrf.mxu0
      %v796 = vadd.f32 0.0, %v795
      %v797 = vpop.f32.mrf.mxu0
      %v798 = vadd.f32 0.0, %v797
      %799 = vmatmul.bf16.gmra.mxu0 %v772
      %v800 = vpop.f32.mrf.mxu0
      %v801 = vadd.f32 0.0, %v800
      %v802 = vpop.f32.mrf.mxu0
      %v803 = vadd.f32 0.0, %v802
      %804 = vmatmul.bf16.gmra.mxu0 %v775
      %v805 = vpop.f32.mrf.mxu0
      %v806 = vadd.f32 0.0, %v805
      %v807 = vpop.f32.mrf.mxu0
      %v808 = vadd.f32 0.0, %v807
      %809 = vmatmul.bf16.gmra.mxu0 %v778
      %v810 = vpop.f32.mrf.mxu0
      %v811 = vadd.f32 0.0, %v810
      %v812 = vpop.f32.mrf.mxu0
      %v813 = vadd.f32 0.0, %v812
      %814 = vmatmul.bf16.gmra.mxu0 %v781
      %v815 = vpop.f32.mrf.mxu0
      %v816 = vadd.f32 0.0, %v815
      %v817 = vpop.f32.mrf.mxu0
      %818 = vdwg.mxu0
      %v819 = vadd.f32 %v712, %v796
      %v820 = vadd.f32 %v713, %v798
      %v821 = vadd.f32 %v714, %v801
      %v822 = vadd.f32 %v715, %v803
      %v823 = vadd.f32 %v716, %v806
      %v824 = vadd.f32 %v717, %v808
      %v825 = vadd.f32 %v718, %v811
      %v826 = vadd.f32 %v719, %v813
      %v827 = vadd.f32 %v720, %v816
      %v828 = vld [vmem:[%s232 + $0x7c] sm:$0x7]
      %s829 = scalar_lea.vmem %s239, 20
      %v830 = vld [vmem:[%s829] sm:$0xf]
      %v832 = vunpack.c.l.b16 %v828
      %v833 = vpack.c.b16 %v832, %v644
      %vm834 = vsmask.f32 5376
      %v836 = vshrl.u32 %v646, 16
      %v838 = vrot.slane %v836, 2
      %v839 = vshll.u32 %v646, 16
      %v841 = vrot.slane %v839, 3
      %v842 = vor.u32 %v838, %v841
      %v844 = vshrl.u32 %v647, 16
      %v846 = vrot.slane %v844, 2
      %v847 = vshll.u32 %v647, 16
      %v849 = vrot.slane %v847, 3
      %v850 = vor.u32 %v846, %v849
      %v851 = vsel %vm834, %v842, %v850
      %v853 = vshrl.u32 %v648, 16
      %v855 = vrot.slane %v853, 2
      %v856 = vshll.u32 %v648, 16
      %v858 = vrot.slane %v856, 3
      %v859 = vor.u32 %v855, %v858
      %v860 = vsel %vm834, %v850, %v859
      %v862 = vshrl.u32 %v649, 16
      %v864 = vrot.slane %v862, 2
      %v865 = vshll.u32 %v649, 16
      %v867 = vrot.slane %v865, 3
      %v868 = vor.u32 %v864, %v867
      %v869 = vsel %vm834, %v859, %v868
      %v871 = vshrl.u32 %v833, 16
      %v873 = vrot.slane %v871, 2
      %v874 = vshll.u32 %v833, 16
      %v876 = vrot.slane %v874, 3
      %v877 = vor.u32 %v873, %v876
      %v878 = vsel %vm834, %v868, %v877
      %v880 = vsel %vm308, %v851, 0
      %v883 = vsel %vm308, %v860, 0
      %v886 = vsel %vm308, %v869, 0
      %v889 = vsel %vm308, %v878, 0
      %v892 = vsel %vm308, %v877, 0
      %v895 = vsel %vm324, %v830, 0
      %897 = vmatpush.bf16.msra.mxu0 0
      %898 = vmatpush.bf16.msra.mxu0 0
      %899 = vmatpush.bf16.msra.mxu0 0
      %900 = vmatpush.bf16.msra.mxu0 0
      %901 = vmatpush.bf16.msra.mxu0 0
      %902 = vmatpush.bf16.msra.mxu0 0
      %903 = vmatpush.bf16.msra.mxu0 0
      %904 = vmatpush.bf16.msra.mxu0 %v895
      %905 = vmatmul.bf16.gmra.mxu0 %v880
      %v906 = vpop.f32.mrf.mxu0
      %v907 = vadd.f32 0.0, %v906
      %v908 = vpop.f32.mrf.mxu0
      %v909 = vadd.f32 0.0, %v908
      %910 = vmatmul.bf16.gmra.mxu0 %v883
      %v911 = vpop.f32.mrf.mxu0
      %v912 = vadd.f32 0.0, %v911
      %v913 = vpop.f32.mrf.mxu0
      %v914 = vadd.f32 0.0, %v913
      %915 = vmatmul.bf16.gmra.mxu0 %v886
      %v916 = vpop.f32.mrf.mxu0
      %v917 = vadd.f32 0.0, %v916
      %v918 = vpop.f32.mrf.mxu0
      %v919 = vadd.f32 0.0, %v918
      %920 = vmatmul.bf16.gmra.mxu0 %v889
      %v921 = vpop.f32.mrf.mxu0
      %v922 = vadd.f32 0.0, %v921
      %v923 = vpop.f32.mrf.mxu0
      %v924 = vadd.f32 0.0, %v923
      %925 = vmatmul.bf16.gmra.mxu0 %v892
      %v926 = vpop.f32.mrf.mxu0
      %v927 = vadd.f32 0.0, %v926
      %v928 = vpop.f32.mrf.mxu0
      %929 = vdwg.mxu0
      %v930 = vadd.f32 %v819, %v907
      %v931 = vadd.f32 %v820, %v909
      %v932 = vadd.f32 %v821, %v912
      %v933 = vadd.f32 %v822, %v914
      %v934 = vadd.f32 %v823, %v917
      %v935 = vadd.f32 %v824, %v919
      %v936 = vadd.f32 %v825, %v922
      %v937 = vadd.f32 %v826, %v924
      %v938 = vadd.f32 %v827, %v927
      %v939 = vld [vmem:[%s232 + $0x4] sm:$0xf]
      %v940 = vld [vmem:[%s232 + $0x8] sm:$0xf]
      %v941 = vld [vmem:[%s232 + $0xc] sm:$0xf]
      %v942 = vld [vmem:[%s232 + $0x10] sm:$0xf]
      %v943 = vld [vmem:[%s232 + $0x14] sm:$0xf]
      %v944 = vld [vmem:[%s232 + $0x18] sm:$0xf]
      %v945 = vld [vmem:[%s232 + $0x1c] sm:$0xf]
      %v946 = vld [vmem:[%s232 + $0x20] sm:$0xf]
      %v947 = vld [vmem:[%s232 + $0x24] sm:$0xf]
      %v948 = vld [vmem:[%s232 + $0x28] sm:$0x1]
      %s949 = scalar_lea.vmem %s239, 24
      %v950 = vld [vmem:[%s949] sm:$0xf]
      %v961 = vunpack.c.l.b16 %v939
      %v962 = vunpack.c.l.b16 %v940
      %v963 = vunpack.c.l.b16 %v941
      %v964 = vunpack.c.l.b16 %v942
      %v965 = vunpack.c.l.b16 %v943
      %v966 = vunpack.c.l.b16 %v944
      %v967 = vunpack.c.l.b16 %v945
      %v968 = vunpack.c.l.b16 %v946
      %v969 = vunpack.c.l.b16 %v947
      %v970 = vunpack.c.l.b16 %v948
      %v971 = vpack.c.b16 %v962, %v961
      %v972 = vpack.c.b16 %v964, %v963
      %v973 = vpack.c.b16 %v966, %v965
      %v974 = vpack.c.b16 %v968, %v967
      %v975 = vpack.c.b16 %v970, %v969
      %v977 = vshrl.u32 %v971, 16
      %v979 = vshll.u32 %v971, 16
      %v981 = vrot.slane %v979, 1
      %v982 = vor.u32 %v977, %v981
      %v984 = vshll.u32 %v972, 16
      %v986 = vrot.slane %v984, 1
      %v987 = vsel %vm514, %v982, %v986
      %v988 = vshrl.u32 %v972, 16
      %v990 = vor.u32 %v988, %v986
      %v992 = vshll.u32 %v973, 16
      %v994 = vrot.slane %v992, 1
      %v995 = vsel %vm514, %v990, %v994
      %v996 = vshrl.u32 %v973, 16
      %v998 = vor.u32 %v996, %v994
      %v1000 = vshll.u32 %v974, 16
      %v1002 = vrot.slane %v1000, 1
      %v1003 = vsel %vm514, %v998, %v1002
      %v1004 = vshrl.u32 %v974, 16
      %v1006 = vor.u32 %v1004, %v1002
      %v1008 = vshll.u32 %v975, 16
      %v1010 = vrot.slane %v1008, 1
      %v1011 = vsel %vm514, %v1006, %v1010
      %v1012 = vshrl.u32 %v975, 16
      %v1014 = vor.u32 %v1012, %v1010
      %v1016 = vsel %vm308, %v987, 0
      %v1019 = vsel %vm308, %v995, 0
      %v1022 = vsel %vm308, %v1003, 0
      %v1025 = vsel %vm308, %v1011, 0
      %v1028 = vsel %vm308, %v1014, 0
      %v1031 = vsel %vm324, %v950, 0
      %1033 = vmatpush.bf16.msra.mxu0 0
      %1034 = vmatpush.bf16.msra.mxu0 0
      %1035 = vmatpush.bf16.msra.mxu0 0
      %1036 = vmatpush.bf16.msra.mxu0 0
      %1037 = vmatpush.bf16.msra.mxu0 0
      %1038 = vmatpush.bf16.msra.mxu0 0
      %1039 = vmatpush.bf16.msra.mxu0 0
      %1040 = vmatpush.bf16.msra.mxu0 %v1031
      %1041 = vmatmul.bf16.gmra.mxu0 %v1016
      %v1042 = vpop.f32.mrf.mxu0
      %v1043 = vadd.f32 0.0, %v1042
      %v1044 = vpop.f32.mrf.mxu0
      %v1045 = vadd.f32 0.0, %v1044
      %1046 = vmatmul.bf16.gmra.mxu0 %v1019
      %v1047 = vpop.f32.mrf.mxu0
      %v1048 = vadd.f32 0.0, %v1047
      %v1049 = vpop.f32.mrf.mxu0
      %v1050 = vadd.f32 0.0, %v1049
      %1051 = vmatmul.bf16.gmra.mxu0 %v1022
      %v1052 = vpop.f32.mrf.mxu0
      %v1053 = vadd.f32 0.0, %v1052
      %v1054 = vpop.f32.mrf.mxu0
      %v1055 = vadd.f32 0.0, %v1054
      %1056 = vmatmul.bf16.gmra.mxu0 %v1025
      %v1057 = vpop.f32.mrf.mxu0
      %v1058 = vadd.f32 0.0, %v1057
      %v1059 = vpop.f32.mrf.mxu0
      %v1060 = vadd.f32 0.0, %v1059
      %1061 = vmatmul.bf16.gmra.mxu0 %v1028
      %v1062 = vpop.f32.mrf.mxu0
      %v1063 = vadd.f32 0.0, %v1062
      %v1064 = vpop.f32.mrf.mxu0
      %1065 = vdwg.mxu0
      %v1066 = vadd.f32 %v930, %v1043
      %v1067 = vadd.f32 %v931, %v1045
      %v1068 = vadd.f32 %v932, %v1048
      %v1069 = vadd.f32 %v933, %v1050
      %v1070 = vadd.f32 %v934, %v1053
      %v1071 = vadd.f32 %v935, %v1055
      %v1072 = vadd.f32 %v936, %v1058
      %v1073 = vadd.f32 %v937, %v1060
      %v1074 = vadd.f32 %v938, %v1063
      %v1075 = vld [vmem:[%s232 + $0x30] sm:$0xe]
      %v1076 = vld [vmem:[%s232 + $0x34] sm:$0xf]
      %v1077 = vld [vmem:[%s232 + $0x38] sm:$0xf]
      %v1078 = vld [vmem:[%s232 + $0x3c] sm:$0xf]
      %v1079 = vld [vmem:[%s232 + $0x40] sm:$0xf]
      %v1080 = vld [vmem:[%s232 + $0x44] sm:$0xf]
      %v1081 = vld [vmem:[%s232 + $0x48] sm:$0xf]
      %v1082 = vld [vmem:[%s232 + $0x4c] sm:$0xf]
      %v1083 = vld [vmem:[%s232 + $0x50] sm:$0xf]
      %v1084 = vld [vmem:[%s232 + $0x54] sm:$0x3]
      %s1085 = scalar_lea.vmem %s239, 28
      %v1086 = vld [vmem:[%s1085] sm:$0xf]
      %v1097 = vunpack.c.l.b16 %v1075
      %v1098 = vunpack.c.l.b16 %v1076
      %v1099 = vunpack.c.l.b16 %v1077
      %v1100 = vunpack.c.l.b16 %v1078
      %v1101 = vunpack.c.l.b16 %v1079
      %v1102 = vunpack.c.l.b16 %v1080
      %v1103 = vunpack.c.l.b16 %v1081
      %v1104 = vunpack.c.l.b16 %v1082
      %v1105 = vunpack.c.l.b16 %v1083
      %v1106 = vunpack.c.l.b16 %v1084
      %v1107 = vpack.c.b16 %v1098, %v1097
      %v1108 = vpack.c.b16 %v1100, %v1099
      %v1109 = vpack.c.b16 %v1102, %v1101
      %v1110 = vpack.c.b16 %v1104, %v1103
      %v1111 = vpack.c.b16 %v1106, %v1105
      %vm1112 = vsmask.f32 6400
      %v1114 = vshrl.u32 %v1107, 16
      %v1116 = vrot.slane %v1114, 1
      %v1117 = vshll.u32 %v1107, 16
      %v1119 = vrot.slane %v1117, 2
      %v1120 = vor.u32 %v1116, %v1119
      %v1122 = vshrl.u32 %v1108, 16
      %v1124 = vrot.slane %v1122, 1
      %v1125 = vshll.u32 %v1108, 16
      %v1127 = vrot.slane %v1125, 2
      %v1128 = vor.u32 %v1124, %v1127
      %v1129 = vsel %vm1112, %v1120, %v1128
      %v1131 = vshrl.u32 %v1109, 16
      %v1133 = vrot.slane %v1131, 1
      %v1134 = vshll.u32 %v1109, 16
      %v1136 = vrot.slane %v1134, 2
      %v1137 = vor.u32 %v1133, %v1136
      %v1138 = vsel %vm1112, %v1128, %v1137
      %v1140 = vshrl.u32 %v1110, 16
      %v1142 = vrot.slane %v1140, 1
      %v1143 = vshll.u32 %v1110, 16
      %v1145 = vrot.slane %v1143, 2
      %v1146 = vor.u32 %v1142, %v1145
      %v1147 = vsel %vm1112, %v1137, %v1146
      %v1149 = vshrl.u32 %v1111, 16
      %v1151 = vrot.slane %v1149, 1
      %v1152 = vshll.u32 %v1111, 16
      %v1154 = vrot.slane %v1152, 2
      %v1155 = vor.u32 %v1151, %v1154
      %v1156 = vsel %vm1112, %v1146, %v1155
      %v1158 = vsel %vm308, %v1129, 0
      %v1161 = vsel %vm308, %v1138, 0
      %v1164 = vsel %vm308, %v1147, 0
      %v1167 = vsel %vm308, %v1156, 0
      %v1170 = vsel %vm308, %v1155, 0
      %v1173 = vsel %vm324, %v1086, 0
      %1175 = vmatpush.bf16.msra.mxu0 0
      %1176 = vmatpush.bf16.msra.mxu0 0
      %1177 = vmatpush.bf16.msra.mxu0 0
      %1178 = vmatpush.bf16.msra.mxu0 0
      %1179 = vmatpush.bf16.msra.mxu0 0
      %1180 = vmatpush.bf16.msra.mxu0 0
      %1181 = vmatpush.bf16.msra.mxu0 0
      %1182 = vmatpush.bf16.msra.mxu0 %v1173
      %1183 = vmatmul.bf16.gmra.mxu0 %v1158
      %v1184 = vpop.f32.mrf.mxu0
      %v1185 = vadd.f32 0.0, %v1184
      %v1186 = vpop.f32.mrf.mxu0
      %v1187 = vadd.f32 0.0, %v1186
      %1188 = vmatmul.bf16.gmra.mxu0 %v1161
      %v1189 = vpop.f32.mrf.mxu0
      %v1190 = vadd.f32 0.0, %v1189
      %v1191 = vpop.f32.mrf.mxu0
      %v1192 = vadd.f32 0.0, %v1191
      %1193 = vmatmul.bf16.gmra.mxu0 %v1164
      %v1194 = vpop.f32.mrf.mxu0
      %v1195 = vadd.f32 0.0, %v1194
      %v1196 = vpop.f32.mrf.mxu0
      %v1197 = vadd.f32 0.0, %v1196
      %1198 = vmatmul.bf16.gmra.mxu0 %v1167
      %v1199 = vpop.f32.mrf.mxu0
      %v1200 = vadd.f32 0.0, %v1199
      %v1201 = vpop.f32.mrf.mxu0
      %v1202 = vadd.f32 0.0, %v1201
      %1203 = vmatmul.bf16.gmra.mxu0 %v1170
      %v1204 = vpop.f32.mrf.mxu0
      %v1205 = vadd.f32 0.0, %v1204
      %v1206 = vpop.f32.mrf.mxu0
      %1207 = vdwg.mxu0
      %v1208 = vadd.f32 %v1066, %v1185
      %v1209 = vadd.f32 %v1067, %v1187
      %v1210 = vadd.f32 %v1068, %v1190
      %v1211 = vadd.f32 %v1069, %v1192
      %v1212 = vadd.f32 %v1070, %v1195
      %v1213 = vadd.f32 %v1071, %v1197
      %v1214 = vadd.f32 %v1072, %v1200
      %v1215 = vadd.f32 %v1073, %v1202
      %v1216 = vadd.f32 %v1074, %v1205
      %v1217 = vld [vmem:[%s232 + $0x4] sm:$0xe]
      %s1218 = scalar_lea.vmem %s239, 32
      %v1219 = vld [vmem:[%s1218] sm:$0xf]
      %v1221 = vunpack.c.l.b16 %v1217
      %v1222 = vpack.c.b16 %v962, %v1221
      %v1223 = vrot.slane %v1222, 1
      %v1224 = vrot.slane %v972, 1
      %v1225 = vsel %vm407, %v1223, %v1224
      %v1226 = vrot.slane %v973, 1
      %v1227 = vsel %vm407, %v1224, %v1226
      %v1228 = vrot.slane %v974, 1
      %v1229 = vsel %vm407, %v1226, %v1228
      %v1230 = vrot.slane %v975, 1
      %v1231 = vsel %vm407, %v1228, %v1230
      %v1233 = vsel %vm308, %v1225, 0
      %v1236 = vsel %vm308, %v1227, 0
      %v1239 = vsel %vm308, %v1229, 0
      %v1242 = vsel %vm308, %v1231, 0
      %v1245 = vsel %vm308, %v1230, 0
      %v1248 = vsel %vm324, %v1219, 0
      %1250 = vmatpush.bf16.msra.mxu0 0
      %1251 = vmatpush.bf16.msra.mxu0 0
      %1252 = vmatpush.bf16.msra.mxu0 0
      %1253 = vmatpush.bf16.msra.mxu0 0
      %1254 = vmatpush.bf16.msra.mxu0 0
      %1255 = vmatpush.bf16.msra.mxu0 0
      %1256 = vmatpush.bf16.msra.mxu0 0
      %1257 = vmatpush.bf16.msra.mxu0 %v1248
      %1258 = vmatmul.bf16.gmra.mxu0 %v1233
      %v1259 = vpop.f32.mrf.mxu0
      %v1260 = vadd.f32 0.0, %v1259
      %v1261 = vpop.f32.mrf.mxu0
      %v1262 = vadd.f32 0.0, %v1261
      %1263 = vmatmul.bf16.gmra.mxu0 %v1236
      %v1264 = vpop.f32.mrf.mxu0
      %v1265 = vadd.f32 0.0, %v1264
      %v1266 = vpop.f32.mrf.mxu0
      %v1267 = vadd.f32 0.0, %v1266
      %1268 = vmatmul.bf16.gmra.mxu0 %v1239
      %v1269 = vpop.f32.mrf.mxu0
      %v1270 = vadd.f32 0.0, %v1269
      %v1271 = vpop.f32.mrf.mxu0
      %v1272 = vadd.f32 0.0, %v1271
      %1273 = vmatmul.bf16.gmra.mxu0 %v1242
      %v1274 = vpop.f32.mrf.mxu0
      %v1275 = vadd.f32 0.0, %v1274
      %v1276 = vpop.f32.mrf.mxu0
      %v1277 = vadd.f32 0.0, %v1276
      %1278 = vmatmul.bf16.gmra.mxu0 %v1245
      %v1279 = vpop.f32.mrf.mxu0
      %v1280 = vadd.f32 0.0, %v1279
      %v1281 = vpop.f32.mrf.mxu0
      %1282 = vdwg.mxu0
      %v1283 = vadd.f32 %v1208, %v1260
      %v1284 = vadd.f32 %v1209, %v1262
      %v1285 = vadd.f32 %v1210, %v1265
      %v1286 = vadd.f32 %v1211, %v1267
      %v1287 = vadd.f32 %v1212, %v1270
      %v1288 = vadd.f32 %v1213, %v1272
      %v1289 = vadd.f32 %v1214, %v1275
      %v1290 = vadd.f32 %v1215, %v1277
      %v1291 = vadd.f32 %v1216, %v1280
      %1292 = vst.msk [vmem:[#allocation2] sm:$0xff] %vm308, %v1283
      %1293 = vst.msk [vmem:[#allocation2 + $0x8] sm:$0xff] %vm308, %v1284
      %1294 = vst.msk [vmem:[#allocation2 + $0x10] sm:$0xff] %vm308, %v1285
      %1295 = vst.msk [vmem:[#allocation2 + $0x18] sm:$0xff] %vm308, %v1286
      %1296 = vst.msk [vmem:[#allocation2 + $0x20] sm:$0xff] %vm308, %v1287
      %1297 = vst.msk [vmem:[#allocation2 + $0x28] sm:$0xff] %vm308, %v1288
      %1298 = vst.msk [vmem:[#allocation2 + $0x30] sm:$0xff] %vm308, %v1289
      %1299 = vst.msk [vmem:[#allocation2 + $0x38] sm:$0xff] %vm308, %v1290
      %1300 = vst.msk [vmem:[#allocation2 + $0x40] sm:$0xff] %vm308, %v1291
      // Predicated region
      $region37: #{tpu_custom_call.1} parent=31 // pred_check
        %p1301 = pneg %p252
      $region38: #{tpu_custom_call.1} parent=31 // pred_check_branch
        %1303 = sbr.rel (%p1301) target = $region40
      $region39: #{tpu_custom_call.1} parent=31 // pred_region
        %v1304 = vld [vmem:[%s242] sm:$0x1]
        %v1306 = vperm.slane %v1304, 0
        %v1308 = vadd.f32 %v1283, %v1306
        %v1309 = vadd.f32 %v1284, %v1306
        %v1310 = vadd.f32 %v1285, %v1306
        %v1311 = vadd.f32 %v1286, %v1306
        %v1312 = vadd.f32 %v1287, %v1306
        %v1313 = vadd.f32 %v1288, %v1306
        %v1314 = vadd.f32 %v1289, %v1306
        %v1315 = vadd.f32 %v1290, %v1306
        %v1316 = vadd.f32 %v1291, %v1306
        %v1317 = vmax.f32 %v1308, 0.0
        %v1318 = vmax.f32 %v1309, 0.0
        %v1319 = vmax.f32 %v1310, 0.0
        %v1320 = vmax.f32 %v1311, 0.0
        %v1321 = vmax.f32 %v1312, 0.0
        %v1322 = vmax.f32 %v1313, 0.0
        %v1323 = vmax.f32 %v1314, 0.0
        %v1324 = vmax.f32 %v1315, 0.0
        %v1325 = vmax.f32 %v1316, 0.0
        %v1326 = vpack.c.bf16 %v1317, %v1317
        %v1327 = vpack.c.bf16 %v1318, %v1318
        %v1328 = vpack.c.bf16 %v1319, %v1319
        %v1329 = vpack.c.bf16 %v1320, %v1320
        %v1330 = vpack.c.bf16 %v1321, %v1321
        %v1331 = vpack.c.bf16 %v1322, %v1322
        %v1332 = vpack.c.bf16 %v1323, %v1323
        %v1333 = vpack.c.bf16 %v1324, %v1324
        %v1334 = vpack.c.bf16 %v1325, %v1325
        %vm1335 = vcmask 60416
        %1336 = vst.msk [vmem:[%s250] sm:$0xf] %vm1335, %v1326
        %1337 = vst.msk [vmem:[%s250 + $0x4] sm:$0xf] %vm1335, %v1327
        %1338 = vst.msk [vmem:[%s250 + $0x8] sm:$0xf] %vm1335, %v1328
        %1339 = vst.msk [vmem:[%s250 + $0xc] sm:$0xf] %vm1335, %v1329
        %1340 = vst.msk [vmem:[%s250 + $0x10] sm:$0xf] %vm1335, %v1330
        %1341 = vst.msk [vmem:[%s250 + $0x14] sm:$0xf] %vm1335, %v1331
        %1342 = vst.msk [vmem:[%s250 + $0x18] sm:$0xf] %vm1335, %v1332
        %1343 = vst.msk [vmem:[%s250 + $0x1c] sm:$0xf] %vm1335, %v1333
        %1344 = vst.msk [vmem:[%s250 + $0x20] sm:$0xf] %vm1335, %v1334
      $region40: #{tpu_custom_call.1} parent=31 // pred_fallthru
        _
      %p1345 = scmp.lt.s32.totalorder %s19, 1
      %s1346 = scalar_select %p1345, %s19, 1
      %p1347 = scmp.lt.s32.totalorder %s20, 0
      %s1348 = scalar_select %p1347, %s20, 0
      %s1349 = smul.addr %s1346, 9
      %s1350 = sadd.s32 %s1348, %s1349
      %s1351 = smul.addr %s1350, 4
      %s1352 = scalar_lea.vmem %s3, %s1351
      // Predicated region
      $region41: #{tpu_custom_call.1} parent=31 // pred_check
        %p1353 = pneg %p135
      $region42: #{tpu_custom_call.1} parent=31 // pred_check_branch
        %1355 = sbr.rel (%p1353) target = $region44
      $region43: #{tpu_custom_call.1} parent=31 // pred_region
        _
      $region44: #{tpu_custom_call.1} parent=31 // pred_fallthru
        _
    $region32: #{tpu_custom_call.1} parent=5 // pred_fallthru
      _
    %p1356 = scmp.le.s32.totalorder 2, %s9
    // Predicated region
    $region45: #{tpu_custom_call.1} parent=5 // pred_check
      %p1357 = pneg %p1356
    $region46: #{tpu_custom_call.1} parent=5 // pred_check_branch
      %1359 = sbr.rel (%p1357) target = $region48
    $region47: #{tpu_custom_call.1} parent=5 // pred_region
      %s1360 = ssub.s32 %s9, 2
      // Predicated region
      $region49: #{tpu_custom_call.1} parent=47 // pred_check
        %p1361 = pneg %p141
      $region50: #{tpu_custom_call.1} parent=47 // pred_check_branch
        %1363 = sbr.rel (%p1361) target = $region52
      $region51: #{tpu_custom_call.1} parent=47 // pred_region
        %p1364 = scmp.lt.s32.totalorder %s22, 1
        %s1365 = scalar_select %p1364, %s22, 1
        %p1366 = scmp.lt.s32.totalorder %s23, 0
        %s1367 = scalar_select %p1366, %s23, 0
        %s1368 = smul.addr %s1365, 9
        %s1369 = sadd.s32 %s1367, %s1368
        %s1370 = smul.addr %s1369, 4
        %s1371 = scalar_lea.vmem %s3, %s1370
      $region52: #{tpu_custom_call.1} parent=47 // pred_fallthru
        _
    $region48: #{tpu_custom_call.1} parent=5 // pred_fallthru
      _
  $region6: #{tpu_custom_call.1} parent=0 // loop_footer
    %s13 = sadd.s32 1, %s9
  $region7: #{tpu_custom_call.1} parent=0 // loop_footer_branch
    %8 = sbr.rel target = $region3
  $region8: #{tpu_custom_call.1} parent=0 // loop_exit
    _

</llo_original>
